<compile_context>
chip_gen: v7x
topology: tpu7x:2x2x1
jax: 0.10.0
libtpu: 0.0.40
codegen_flags: <defaults>
</compile_context>

<pallas_src>
import functools

import jax
import jax.numpy as jnp
from jax import lax
from jax.experimental import pallas as pl
from jax.experimental.pallas import tpu as pltpu

LANE = 128                      # output last dim padded to a multiple of this (lane-dense stores)
SUBLANE = 8
DEFAULT_TOKEN_BLOCK = 512       # tokens gathered per grid step (review: 256-1024)
# Headroom under the default scoped VMEM limit (16/32 MiB): the table input is
# double-buffered by the pipeline, plus the ids/output tiles.
_MAX_RESIDENT_TABLE_BYTES = 12 * 1024 * 1024


def _round_up(x, m):
    return (x + m - 1) // m * m


def _embedding_lookup_kernel(ids_ref, emb_ref, out_ref):
    """Vectorized gather of one token tile.

    ids_ref : VMEM (token_block, 1)       int32  -- token ids for this tile
    emb_ref : VMEM (vocab, dim_pad)       bf16   -- full (lane-padded) embedding table
    out_ref : VMEM (token_block, dim_pad) f32
    """
    ids = ids_ref[...]                                   # (tb, 1)
    tb = ids.shape[0]
    vocab = emb_ref.shape[0]
    # One-hot selection matrix; a single MXU matmul then produces the whole
    # (tb, dim_pad) tile with dense vregs and unmasked full-lane stores.
    col = lax.broadcasted_iota(jnp.int32, (tb, vocab), 1)
    one_hot = (col == ids).astype(emb_ref.dtype)         # (tb, vocab)
    out_ref[...] = jnp.dot(one_hot, emb_ref[...],
                           preferred_element_type=jnp.float32)


@functools.partial(jax.jit, static_argnames=("token_block",))
def _embedding_lookup(ids_col, table_padded, *, token_block):
    n_tokens_padded = ids_col.shape[0]
    vocab, dim_pad = table_padded.shape
    grid = (n_tokens_padded // token_block,)
    return pl.pallas_call(
        _embedding_lookup_kernel,
        out_shape=jax.ShapeDtypeStruct((n_tokens_padded, dim_pad), jnp.float32),
        grid=grid,
        in_specs=[
            pl.BlockSpec((token_block, 1), lambda i: (i, 0)),
            # Full table, same block every grid step.
            pl.BlockSpec((vocab, dim_pad), lambda i: (0, 0)),
        ],
        out_specs=pl.BlockSpec((token_block, dim_pad), lambda i: (i, 0)),
        compiler_params=pltpu.CompilerParams(
            # Output tiles are independent -> let v7x's 2 TCs split the token axis.
            dimension_semantics=("parallel",),
        ),
    )(ids_col, table_padded)


class BaseModelPallas:
    """JAX/Pallas analogue of BaseModel: holds an embedding table and looks it up."""

    def __init__(self):
        self.embedding = None          # (vocab, embed_dim) bf16 storage
        self._table_padded = None      # (vocab, round_up(embed_dim, 128)) bf16
        self.device = None

    def set_embedding(self, vocab_size, embed_dim, pretrained_embedding=None,
                      table_dtype=jnp.bfloat16):
        if pretrained_embedding is not None:
            table = jnp.asarray(pretrained_embedding)
        else:
            # nn.Embedding default init: N(0, 1).
            table = jax.random.normal(jax.random.PRNGKey(0),
                                      (vocab_size, embed_dim), dtype=jnp.float32)
        # bf16 storage: the lookup has zero arithmetic and is bandwidth-bound,
        # so halving bytes halves HBM/VMEM traffic and the VMEM footprint.
        # TODO(synk): use float32 storage if exact nn.Embedding numerics are required.
        table = table.astype(table_dtype)
        dim_pad = _round_up(embed_dim, LANE)
        padded = jnp.pad(table, ((0, 0), (0, dim_pad - embed_dim)))
        if 2 * padded.size * padded.dtype.itemsize > _MAX_RESIDENT_TABLE_BYTES:
            raise ValueError(
                "Embedding table too large for the resident-in-VMEM kernel; "
                "use the HBM row-gather DMA path (see TODO at top of file).")
        self.embedding = table
        self._table_padded = padded

    def set_device(self, device):
        self.device = device  # no-op under JAX; kept for API parity

    def embed(self, ids):
        """ids: (batch, seq) integer -> (batch, seq, embed_dim) float32."""
        batch, seq = ids.shape
        vocab, embed_dim = self.embedding.shape
        n_tokens = batch * seq

        # Clamp (nn.Embedding would raise on OOB; Pallas VMEM has no runtime check).
        flat = jnp.clip(ids.reshape(-1).astype(jnp.int32), 0, vocab - 1)
        token_block = min(DEFAULT_TOKEN_BLOCK, _round_up(n_tokens, SUBLANE))
        n_pad = _round_up(n_tokens, token_block)
        flat = jnp.pad(flat, (0, n_pad - n_tokens))
        ids_col = flat.reshape(n_pad, 1)

        out = _embedding_lookup(ids_col, self._table_padded, token_block=token_block)
        out = out[:n_tokens, :embed_dim]
        return out.reshape(batch, seq, embed_dim)


if __name__ == "__main__":
    vocab_size, embed_dim = 64, 32
    batch, seq = 2, 8

    model = BaseModelPallas()
    model.set_embedding(vocab_size, embed_dim)

    key = jax.random.PRNGKey(0)
    ids = jax.random.randint(key, (batch, seq), 0, vocab_size, dtype=jnp.int32)

    out = jax.block_until_ready(model.embed(ids))

    # Reference check against plain JAX gather on the same (bf16) table.
    ref = jnp.take(model.embedding, ids.reshape(-1), axis=0).astype(jnp.float32)
    ref = ref.reshape(batch, seq, embed_dim)
    assert out.shape == (batch, seq, embed_dim)
    assert out.dtype == jnp.float32
    assert jnp.allclose(out, ref), "Pallas embedding lookup mismatch"

    print("KERNEL_OK")
</pallas_src>

<mosaic_0001>
module attributes {stable_mosaic.version = 11 : i64} {
  func.func @_embedding_lookup_kernel(%arg0: i32, %arg1: memref<16x1xi32, #tpu.memory_space<vmem>>, %arg2: memref<64x128xbf16, #tpu.memory_space<vmem>>, %arg3: memref<16x128xf32, #tpu.memory_space<vmem>>) attributes {dimension_semantics = [#tpu.dimension_semantics<parallel>], iteration_bounds = array<i64: 1>, scalar_prefetch = 0 : i64, scratch_operands = 0 : i64, tpu.core_type = #tpu.core_type<tc>, window_params = [{transform_indices = @transform_0, window_bounds = array<i64: 16, 1>}, {pipeline_mode = #tpu.pipeline_mode<synchronous>, transform_indices = @transform_1, window_bounds = array<i64: 64, 128>}, {transform_indices = @transform_2, window_bounds = array<i64: 16, 128>}]} {
    %c0 = arith.constant 0 : index
    %c0_0 = arith.constant 0 : index
    %0 = vector.load %arg1[%c0, %c0_0] : memref<16x1xi32, #tpu.memory_space<vmem>>, vector<16x1xi32>
    %1 = tpu.iota {dimensions = array<i32: 1>} : vector<16x64xi32>
    %2 = vector.broadcast %0 : vector<16x1xi32> to vector<16x64xi32>
    %3 = arith.cmpi eq, %1, %2 : vector<16x64xi32>
    %4 = arith.extui %3 : vector<16x64xi1> to vector<16x64xi32>
    %5 = arith.sitofp %4 : vector<16x64xi32> to vector<16x64xf32>
    %6 = arith.truncf %5 : vector<16x64xf32> to vector<16x64xbf16>
    %c0_1 = arith.constant 0 : index
    %c0_2 = arith.constant 0 : index
    %7 = vector.load %arg2[%c0_1, %c0_2] : memref<64x128xbf16, #tpu.memory_space<vmem>>, vector<64x128xbf16>
    %cst = arith.constant dense<0.000000e+00> : vector<16x128xf32>
    %8 = tpu.matmul %6, %7, %cst {dimension_numbers = #tpu.dot_dimension_numbers<[1], [0], [0], [1], [0, 0, 1, 1], [], []>} : vector<16x64xbf16>, vector<64x128xbf16>, vector<16x128xf32> -> vector<16x128xf32>
    %c0_3 = arith.constant 0 : index
    %c0_4 = arith.constant 0 : index
    %9 = vector.load %arg3[%c0_3, %c0_4] : memref<16x128xf32, #tpu.memory_space<vmem>>, vector<16x128xf32>
    tpu.vector_store %arg3[%c0_3, %c0_4], %8 {strides = array<i32>} : memref<16x128xf32, #tpu.memory_space<vmem>>, vector<16x128xf32>,
    return
  }
  func.func @transform_0(%arg0: i32) -> (i32, i32) {
    %c0_i32 = arith.constant 0 : i32
    %c0_i32_0 = arith.constant 0 : i32
    return %arg0, %c0_i32 : i32, i32
  }
  func.func @transform_1(%arg0: i32) -> (i32, i32) {
    %c0_i32 = arith.constant 0 : i32
    %c0_i32_0 = arith.constant 0 : i32
    %c0_i32_1 = arith.constant 0 : i32
    return %c0_i32, %c0_i32_0 : i32, i32
  }
  func.func @transform_2(%arg0: i32) -> (i32, i32) {
    %c0_i32 = arith.constant 0 : i32
    %c0_i32_0 = arith.constant 0 : i32
    return %arg0, %c0_i32 : i32, i32
  }
}

</mosaic_0001>

<llo_original>
// kernel: _embedding_lookup.1
$region0: #{_embedding_lookup.1}
  #allocation0 [shape = 'u32[]', space=smem, size = 0x4, offset = 0x4, fixed_abs, tag = 'smem constant byte address 0x4 - core index']
  #allocation1 [shape = 'u32[144,128]{1,0:T(1,128)}', space=vmem, size = 0x12000, scoped, tag = 'internal scratch']
  %s0 = inlined_call_operand.vmem [shape: s32[16,1], index: 0, kind: input, shape index: {}]
  %s1 = inlined_call_operand.hbm [shape: bf16[64,128], index: 1, kind: input, shape index: {}]
  %s2 = inlined_call_operand.hbm [shape: f32[16,128], index: 2, kind: output, shape index: {}]
  %s3 = sld [smem:[#allocation0]]
  $region22: #{_embedding_lookup.1} parent=0
    _
  %s5 = ssub.s32 1, %s3
  %s6 = scalar_select 0, %s5, %s3
  $region1: #{_embedding_lookup.1} parent=0
    #allocation2 [shape = 'u8[16384]{0}', space=vmem, size = 0x4000, scoped, tag = 'input window, operand 1, single buffered']
    #allocation3 [shape = 's32[1]{0}', space=sflag, size = 0x4, scoped, tag = 'scoped memory for _embedding_lookup.1']
    #allocation4 [shape = 's32[1]{0}', space=sflag, size = 0x4, scoped, tag = 'scoped memory for _embedding_lookup.1']
    #allocation5 [shape = 'u8[8192]{0}', space=vmem, size = 0x2000, scoped, tag = 'output window, operand 0, single buffered']
    %7 = vsyncpa [#allocation3], 0
    %8 = vsyncpa [#allocation4], 0
    // Predicated region
    $region2: #{_embedding_lookup.1} parent=1 // pred_check
      _
    $region3: #{_embedding_lookup.1} parent=1 // pred_check_branch
      %10 = sbr.rel (0) target = $region5
    $region4: #{_embedding_lookup.1} parent=1 // pred_region
      _
    $region5: #{_embedding_lookup.1} parent=1 // pred_fallthru
      _
    // Predicated region
    $region6: #{_embedding_lookup.1} parent=1 // pred_check
      _
    $region7: #{_embedding_lookup.1} parent=1 // pred_check_branch
      %12 = sbr.rel (0) target = $region9
    $region8: #{_embedding_lookup.1} parent=1 // pred_region
      %s14 = ssub.s32 512, 512
      %15 = vsyncadd [#allocation3], %s14
      %s16 = sshll.u32 [#allocation2], 4
      %s17 = int_to_ptr.vmem [resolvable:$true] %s16
      %22 = dma.hbm_to_vmem [thread:$0]  %s1, 512, %s17, [#allocation3], 64, 64, 4
    $region9: #{_embedding_lookup.1} parent=1 // pred_fallthru
      _
    // Predicated region
    $region10: #{_embedding_lookup.1} parent=1 // pred_check
      _
    $region11: #{_embedding_lookup.1} parent=1 // pred_check_branch
      %24 = sbr.rel (0) target = $region13
    $region12: #{_embedding_lookup.1} parent=1 // pred_region
      %25 = dma.done [#allocation3], 512
    $region13: #{_embedding_lookup.1} parent=1 // pred_fallthru
      _
    %v27 = vld [vmem:[%s0] sm:$0xff]
    %v28 = vld [vmem:[%s0 + $0x8] sm:$0xff]
    %v29 = vlaneseq
    %v30 = vand.u32 %v29, 127
    %31 = vset.pattern.permute.xlu0 0
    %32 = vperm.xlu0 %31, %v27
    %v33 = vpop.permute.xlu0 %32
    %34 = vset.pattern.permute.xlu0 0
    %35 = vperm.xlu0 %34, %v28
    %v36 = vpop.permute.xlu0 %35
    %vm37 = vcmp.eq.s32.totalorder %v30, %v33
    %vm38 = vcmp.eq.s32.totalorder %v30, %v36
    %v39 = vsel %vm37, 1, 0
    %v40 = vsel %vm38, 1, 0
    %v41 = vcvt.s32.f32 %v39
    %v42 = vcvt.s32.f32 %v40
    %v43 = vpack.c.bf16 %v42, %v41
    %v44 = vld [vmem:[#allocation2] sm:$0xf]
    %v45 = vld [vmem:[#allocation2 + $0x4] sm:$0xf]
    %v46 = vld [vmem:[#allocation2 + $0x8] sm:$0xf]
    %v47 = vld [vmem:[#allocation2 + $0xc] sm:$0xf]
    %v48 = vld [vmem:[#allocation2 + $0x10] sm:$0xf]
    %v49 = vld [vmem:[#allocation2 + $0x14] sm:$0xf]
    %v50 = vld [vmem:[#allocation2 + $0x18] sm:$0xf]
    %v51 = vld [vmem:[#allocation2 + $0x1c] sm:$0xf]
    %v60 = vunpack.c.l.b16 %v44
    %v61 = vunpack.c.l.b16 %v45
    %v62 = vunpack.c.l.b16 %v46
    %v63 = vunpack.c.l.b16 %v47
    %v64 = vunpack.c.l.b16 %v48
    %v65 = vunpack.c.l.b16 %v49
    %v66 = vunpack.c.l.b16 %v50
    %v67 = vunpack.c.l.b16 %v51
    %v68 = vpack.c.b16 %v61, %v60
    %v69 = vpack.c.b16 %v63, %v62
    %v70 = vpack.c.b16 %v65, %v64
    %v71 = vpack.c.b16 %v67, %v66
    %vm76 = vcmask 523264
    %v78 = vsel %vm76, %v43, 0
    %80 = vmatprep.subr.bf16.mxu0 0
    %81 = vmatpush1.bf16.msra.mxu0 %v68
    %82 = vmatprep.subr.bf16.mxu0 0
    %83 = vmatpush1.bf16.msra.mxu0 %v69
    %84 = vmatprep.subr.bf16.mxu0 0
    %85 = vmatpush1.bf16.msra.mxu0 %v70
    %86 = vmatprep.subr.bf16.mxu0 0
    %87 = vmatpush1.bf16.msra.mxu0 %v71
    %88 = vmatprep.subr.bf16.mxu0 0
    %89 = vmatpush1.bf16.msra.mxu0 0
    %90 = vmatprep.subr.bf16.mxu0 0
    %91 = vmatpush1.bf16.msra.mxu0 0
    %92 = vmatprep.subr.bf16.mxu0 0
    %93 = vmatpush1.bf16.msra.mxu0 0
    %94 = vmatprep.subr.bf16.mxu0 0
    %95 = vmatpush1.bf16.msra.mxu0 0
    %96 = vmatprep.subr.bf16.mxu0 0
    %97 = vmatpush1.bf16.msra.mxu0 0
    %98 = vmatprep.subr.bf16.mxu0 0
    %99 = vmatpush1.bf16.msra.mxu0 0
    %100 = vmatprep.subr.bf16.mxu0 0
    %101 = vmatpush1.bf16.msra.mxu0 0
    %102 = vmatprep.subr.bf16.mxu0 0
    %103 = vmatpush1.bf16.msra.mxu0 0
    %104 = vmatprep.subr.bf16.mxu0 0
    %105 = vmatpush1.bf16.msra.mxu0 0
    %106 = vmatprep.subr.bf16.mxu0 0
    %107 = vmatpush1.bf16.msra.mxu0 0
    %108 = vmatprep.subr.bf16.mxu0 0
    %109 = vmatpush1.bf16.msra.mxu0 0
    %110 = vmatprep.subr.bf16.mxu0 0
    %111 = vmatpush1.bf16.msra.mxu0 0
    %112 = vmatprep.mubr.bf16.mxu0 0
    %113 = vmatmul.mubr.bf16.gmra.mrb[0].mxu0 %v78
    %v114 = vpop.f32.mrb[0].mxu0
    %v115 = vadd.f32 0.0, %v114
    %v116 = vpop.f32.mrb[0].mxu0
    %v117 = vpop.f32.mrb[0].mxu0
    %v118 = vadd.f32 0.0, %v117
    %v119 = vpop.f32.mrb[0].mxu0
    %120 = vdwg.mxu0
    %121 = vst [vmem:[#allocation5] sm:$0xff] %v115
    %122 = vst [vmem:[#allocation5 + $0x8] sm:$0xff] %v118
    // Predicated region
    $region14: #{_embedding_lookup.1} parent=1 // pred_check
      _
    $region15: #{_embedding_lookup.1} parent=1 // pred_check_branch
      %124 = sbr.rel (0) target = $region17
    $region16: #{_embedding_lookup.1} parent=1 // pred_region
      %s126 = ssub.s32 256, 256
      %127 = vsyncadd [#allocation4], %s126
      %s128 = sshll.u32 [#allocation5], 4
      %s129 = int_to_ptr.vmem [resolvable:$true] %s128
      %134 = dma.vmem_to_hbm [thread:$0]  %s129, 256, %s2, [#allocation4], 128, 128, 8
    $region17: #{_embedding_lookup.1} parent=1 // pred_fallthru
      _
    // Predicated region
    $region18: #{_embedding_lookup.1} parent=1 // pred_check
      _
    $region19: #{_embedding_lookup.1} parent=1 // pred_check_branch
      %136 = sbr.rel (0) target = $region21
    $region20: #{_embedding_lookup.1} parent=1 // pred_region
      %137 = dma.done [#allocation4], 256
    $region21: #{_embedding_lookup.1} parent=1 // pred_fallthru
      _
    %138 = vsyncpa [#allocation3], 1
    %139 = vsyncpa [#allocation4], 1

</llo_original>
